<compile_context>
chip_gen: v6e
topology: v6e:2x2x1
jax: 0.10.0
libtpu: 0.0.40
codegen_flags: <defaults>
</compile_context>

<pallas_src>
import functools

import jax
import jax.numpy as jnp
from jax.experimental import pallas as pl
from jax.experimental.pallas import tpu as pltpu


def _round_up(a, b):
    return ((a + b - 1) // b) * b


def mlp_kernel(x_ref, w_ref, b_ref, gamma_ref, beta_ref, o_ref, *, eps):
    """Fused MLP block on one (tm, H) row tile.

    x_ref     : (tm, H)  input rows
    w_ref     : (H, H)   linear weight, already transposed (W^T)
    b_ref     : (1, H)   linear bias
    gamma_ref : (1, H)   LayerNorm weight
    beta_ref  : (1, H)   LayerNorm bias
    o_ref     : (tm, H)  output rows
    """
    x = x_ref[...].astype(jnp.float32)

    # delta(x) = Linear(ReLU(x))
    h = jnp.maximum(x, 0.0)
    y = jnp.dot(h, w_ref[...].astype(jnp.float32),
                preferred_element_type=jnp.float32)
    y = y + b_ref[...].astype(jnp.float32)

    # LayerNorm over the feature (lane) axis.
    mean = jnp.mean(y, axis=-1, keepdims=True)
    centered = y - mean
    var = jnp.mean(centered * centered, axis=-1, keepdims=True)
    inv = jax.lax.rsqrt(var + eps)
    normed = centered * inv
    ln = normed * gamma_ref[...].astype(jnp.float32) + beta_ref[...].astype(jnp.float32)

    # Residual: x + LayerNorm(delta(x))
    o_ref[...] = (x + ln).astype(o_ref.dtype)


def mlp_forward(x, w, b, gamma, beta, *, eps=1e-5, block_rows=128):
    """Pallas MLP.forward.

    x : (..., H)   input (leading dims are flattened into rows)
    w : (H, H)     nn.Linear weight (PyTorch layout: (out, in))
    b : (H,)       nn.Linear bias
    gamma, beta : (H,) LayerNorm affine params
    returns: same shape as x
    """
    orig_shape = x.shape
    H = orig_shape[-1]
    x2 = x.reshape(-1, H)
    M = x2.shape[0]

    # Row-tile size: multiple of 8 sublanes, capped at block_rows.
    tm = min(block_rows, _round_up(M, 8))
    m_pad = _round_up(M, tm)
    if m_pad != M:
        x2 = jnp.pad(x2, ((0, m_pad - M), (0, 0)))

    wt = jnp.transpose(w)          # (H, H) — transposed once, outside the kernel
    b2 = b.reshape(1, H)
    g2 = gamma.reshape(1, H)
    be2 = beta.reshape(1, H)

    grid = (m_pad // tm,)
    kernel = functools.partial(mlp_kernel, eps=eps)

    out = pl.pallas_call(
        kernel,
        out_shape=jax.ShapeDtypeStruct((m_pad, H), x.dtype),
        grid=grid,
        in_specs=[
            pl.BlockSpec((tm, H), lambda i: (i, 0)),   # x rows
            pl.BlockSpec((H, H), lambda i: (0, 0)),    # W^T (resident)
            pl.BlockSpec((1, H), lambda i: (0, 0)),    # bias
            pl.BlockSpec((1, H), lambda i: (0, 0)),    # gamma
            pl.BlockSpec((1, H), lambda i: (0, 0)),    # beta
        ],
        out_specs=pl.BlockSpec((tm, H), lambda i: (i, 0)),
        compiler_params=pltpu.CompilerParams(
            dimension_semantics=("parallel",)),
    )(x2, wt, b2, g2, be2)

    return out[:M].reshape(orig_shape)


def mlp_reference(x, w, b, gamma, beta, eps=1e-5):
    """Pure-JAX reference with PyTorch semantics."""
    h = jnp.maximum(x, 0.0)
    y = h @ w.T + b
    mean = y.mean(-1, keepdims=True)
    var = ((y - mean) ** 2).mean(-1, keepdims=True)
    ln = (y - mean) / jnp.sqrt(var + eps) * gamma + beta
    return x + ln


if __name__ == "__main__":
    # Small shapes consistent with MLP(n_dim): batch=2, seq=8, n_dim=32.
    B, T, H = 2, 8, 32

    key = jax.random.PRNGKey(0)
    k_x, k_w, k_b, k_g, k_be = jax.random.split(key, 5)
    scale = 1.0 / jnp.sqrt(jnp.float32(H))   # PyTorch Linear init range

    x = jax.random.normal(k_x, (B, T, H), jnp.float32)
    w = jax.random.uniform(k_w, (H, H), jnp.float32, -scale, scale)
    b = jax.random.uniform(k_b, (H,), jnp.float32, -scale, scale)
    gamma = 1.0 + 0.1 * jax.random.normal(k_g, (H,), jnp.float32)
    beta = 0.1 * jax.random.normal(k_be, (H,), jnp.float32)

    fwd = jax.jit(mlp_forward)
    out = fwd(x, w, b, gamma, beta)
    out = jax.block_until_ready(out)

    ref = mlp_reference(x, w, b, gamma, beta)
    assert out.shape == (B, T, H), out.shape
    assert jnp.allclose(out, ref, atol=1e-5, rtol=1e-5), float(jnp.max(jnp.abs(out - ref)))

    print("KERNEL_OK")
</pallas_src>

<mosaic_0001>
module attributes {stable_mosaic.version = 11 : i64} {
  func.func @mlp_kernel(%arg0: i32, %arg1: memref<16x32xf32, #tpu.memory_space<vmem>>, %arg2: memref<32x32xf32, #tpu.memory_space<vmem>>, %arg3: memref<1x32xf32, #tpu.memory_space<vmem>>, %arg4: memref<1x32xf32, #tpu.memory_space<vmem>>, %arg5: memref<1x32xf32, #tpu.memory_space<vmem>>, %arg6: memref<16x32xf32, #tpu.memory_space<vmem>>) attributes {dimension_semantics = [#tpu.dimension_semantics<parallel>], iteration_bounds = array<i64: 1>, scalar_prefetch = 0 : i64, scratch_operands = 0 : i64, tpu.core_type = #tpu.core_type<tc>, window_params = [{transform_indices = @transform_0, window_bounds = array<i64: 16, 32>}, {pipeline_mode = #tpu.pipeline_mode<synchronous>, transform_indices = @transform_1, window_bounds = array<i64: 32, 32>}, {pipeline_mode = #tpu.pipeline_mode<synchronous>, transform_indices = @transform_2, window_bounds = array<i64: 1, 32>}, {pipeline_mode = #tpu.pipeline_mode<synchronous>, transform_indices = @transform_3, window_bounds = array<i64: 1, 32>}, {pipeline_mode = #tpu.pipeline_mode<synchronous>, transform_indices = @transform_4, window_bounds = array<i64: 1, 32>}, {transform_indices = @transform_5, window_bounds = array<i64: 16, 32>}]} {
    %c0 = arith.constant 0 : index
    %c0_0 = arith.constant 0 : index
    %0 = vector.load %arg1[%c0, %c0_0] : memref<16x32xf32, #tpu.memory_space<vmem>>, vector<16x32xf32>
    %cst = arith.constant 0.000000e+00 : f32
    %1 = vector.broadcast %cst : f32 to vector<16x32xf32>
    %2 = arith.maximumf %0, %1 : vector<16x32xf32>
    %c0_1 = arith.constant 0 : index
    %c0_2 = arith.constant 0 : index
    %3 = vector.load %arg2[%c0_1, %c0_2] : memref<32x32xf32, #tpu.memory_space<vmem>>, vector<32x32xf32>
    %cst_3 = arith.constant dense<0.000000e+00> : vector<16x32xf32>
    %4 = tpu.matmul %2, %3, %cst_3 {dimension_numbers = #tpu.dot_dimension_numbers<[1], [0], [0], [1], [0, 0, 1, 1], [], []>} : vector<16x32xf32>, vector<32x32xf32>, vector<16x32xf32> -> vector<16x32xf32>
    %c0_4 = arith.constant 0 : index
    %c0_5 = arith.constant 0 : index
    %5 = vector.load %arg3[%c0_4, %c0_5] : memref<1x32xf32, #tpu.memory_space<vmem>>, vector<1x32xf32>
    %6 = vector.broadcast %5 : vector<1x32xf32> to vector<16x32xf32>
    %7 = arith.addf %4, %6 : vector<16x32xf32>
    %cst_6 = arith.constant dense<0.000000e+00> : vector<16xf32>
    %8 = vector.multi_reduction <add>, %7, %cst_6 [1] : vector<16x32xf32> to vector<16xf32>
    %9 = vector.shape_cast %8 : vector<16xf32> to vector<16x1xf32>
    %cst_7 = arith.constant 3.200000e+01 : f32
    %10 = vector.broadcast %cst_7 : f32 to vector<16x1xf32>
    %11 = arith.divf %9, %10 : vector<16x1xf32>
    %12 = vector.broadcast %11 : vector<16x1xf32> to vector<16x32xf32>
    %13 = arith.subf %7, %12 : vector<16x32xf32>
    %14 = arith.mulf %13, %13 : vector<16x32xf32>
    %cst_8 = arith.constant dense<0.000000e+00> : vector<16xf32>
    %15 = vector.multi_reduction <add>, %14, %cst_8 [1] : vector<16x32xf32> to vector<16xf32>
    %16 = vector.shape_cast %15 : vector<16xf32> to vector<16x1xf32>
    %cst_9 = arith.constant 3.200000e+01 : f32
    %17 = vector.broadcast %cst_9 : f32 to vector<16x1xf32>
    %18 = arith.divf %16, %17 : vector<16x1xf32>
    %cst_10 = arith.constant 9.99999974E-6 : f32
    %19 = vector.broadcast %cst_10 : f32 to vector<16x1xf32>
    %20 = arith.addf %18, %19 : vector<16x1xf32>
    %21 = math.rsqrt %20 : vector<16x1xf32>
    %22 = vector.broadcast %21 : vector<16x1xf32> to vector<16x32xf32>
    %23 = arith.mulf %13, %22 : vector<16x32xf32>
    %c0_11 = arith.constant 0 : index
    %c0_12 = arith.constant 0 : index
    %24 = vector.load %arg4[%c0_11, %c0_12] : memref<1x32xf32, #tpu.memory_space<vmem>>, vector<1x32xf32>
    %25 = vector.broadcast %24 : vector<1x32xf32> to vector<16x32xf32>
    %26 = arith.mulf %23, %25 : vector<16x32xf32>
    %c0_13 = arith.constant 0 : index
    %c0_14 = arith.constant 0 : index
    %27 = vector.load %arg5[%c0_13, %c0_14] : memref<1x32xf32, #tpu.memory_space<vmem>>, vector<1x32xf32>
    %28 = vector.broadcast %27 : vector<1x32xf32> to vector<16x32xf32>
    %29 = arith.addf %26, %28 : vector<16x32xf32>
    %30 = arith.addf %0, %29 : vector<16x32xf32>
    %c0_15 = arith.constant 0 : index
    %c0_16 = arith.constant 0 : index
    %31 = vector.load %arg6[%c0_15, %c0_16] : memref<16x32xf32, #tpu.memory_space<vmem>>, vector<16x32xf32>
    tpu.vector_store %arg6[%c0_15, %c0_16], %30 {strides = array<i32>} : memref<16x32xf32, #tpu.memory_space<vmem>>, vector<16x32xf32>,
    return
  }
  func.func @transform_0(%arg0: i32) -> (i32, i32) {
    %c0_i32 = arith.constant 0 : i32
    %c0_i32_0 = arith.constant 0 : i32
    return %arg0, %c0_i32 : i32, i32
  }
  func.func @transform_1(%arg0: i32) -> (i32, i32) {
    %c0_i32 = arith.constant 0 : i32
    %c0_i32_0 = arith.constant 0 : i32
    %c0_i32_1 = arith.constant 0 : i32
    return %c0_i32, %c0_i32_0 : i32, i32
  }
  func.func @transform_2(%arg0: i32) -> (i32, i32) {
    %c0_i32 = arith.constant 0 : i32
    %c0_i32_0 = arith.constant 0 : i32
    %c0_i32_1 = arith.constant 0 : i32
    return %c0_i32, %c0_i32_0 : i32, i32
  }
  func.func @transform_3(%arg0: i32) -> (i32, i32) {
    %c0_i32 = arith.constant 0 : i32
    %c0_i32_0 = arith.constant 0 : i32
    %c0_i32_1 = arith.constant 0 : i32
    return %c0_i32, %c0_i32_0 : i32, i32
  }
  func.func @transform_4(%arg0: i32) -> (i32, i32) {
    %c0_i32 = arith.constant 0 : i32
    %c0_i32_0 = arith.constant 0 : i32
    %c0_i32_1 = arith.constant 0 : i32
    return %c0_i32, %c0_i32_0 : i32, i32
  }
  func.func @transform_5(%arg0: i32) -> (i32, i32) {
    %c0_i32 = arith.constant 0 : i32
    %c0_i32_0 = arith.constant 0 : i32
    return %arg0, %c0_i32 : i32, i32
  }
}

</mosaic_0001>

<llo_original>
// kernel: mlp_forward.1
$region0: #{mlp_forward.1}
  #allocation0 [shape = 'u32[]', space=smem, size = 0x4, offset = 0x4, fixed_abs, tag = 'smem constant byte address 0x4 - core index']
  #allocation1 [shape = 'u32[144,128]{1,0:T(1,128)}', space=vmem, size = 0x12000, scoped, tag = 'internal scratch']
  %s0 = inlined_call_operand.vmem [shape: f32[16,32], index: 0, kind: input, shape index: {}]
  %s1 = inlined_call_operand.vmem [shape: f32[32,32], index: 1, kind: input, shape index: {}]
  %s2 = inlined_call_operand.vmem [shape: f32[1,32], index: 2, kind: input, shape index: {}]
  %s3 = inlined_call_operand.vmem [shape: f32[1,32], index: 3, kind: input, shape index: {}]
  %s4 = inlined_call_operand.vmem [shape: f32[1,32], index: 4, kind: input, shape index: {}]
  %s5 = inlined_call_operand.hbm [shape: f32[16,32], index: 5, kind: output, shape index: {}]
  %s6 = sld [smem:[#allocation0]]
  $region30: #{mlp_forward.1} parent=0
    _
  %s8 = ssub.s32 1, %s6
  %s9 = scalar_select 0, %s8, %s6
  $region1: #{mlp_forward.1} parent=0
    #allocation2 [shape = 'u8[8192]{0}', space=vmem, size = 0x2000, scoped, tag = 'output window, operand 0, single buffered']
    #allocation3 [shape = 's32[1]{0}', space=sflag, size = 0x4, scoped, tag = 'scoped memory for mlp_forward.1']
    %10 = vsyncpa [#allocation3], 0
    // Predicated region
    $region2: #{mlp_forward.1} parent=1 // pred_check
      _
    $region3: #{mlp_forward.1} parent=1 // pred_check_branch
      %12 = sbr.rel (0) target = $region5
    $region4: #{mlp_forward.1} parent=1 // pred_region
      _
    $region5: #{mlp_forward.1} parent=1 // pred_fallthru
      _
    // Predicated region
    $region6: #{mlp_forward.1} parent=1 // pred_check
      _
    $region7: #{mlp_forward.1} parent=1 // pred_check_branch
      %14 = sbr.rel (0) target = $region9
    $region8: #{mlp_forward.1} parent=1 // pred_region
      _
    $region9: #{mlp_forward.1} parent=1 // pred_fallthru
      _
    // Predicated region
    $region10: #{mlp_forward.1} parent=1 // pred_check
      _
    $region11: #{mlp_forward.1} parent=1 // pred_check_branch
      %16 = sbr.rel (0) target = $region13
    $region12: #{mlp_forward.1} parent=1 // pred_region
      _
    $region13: #{mlp_forward.1} parent=1 // pred_fallthru
      _
    // Predicated region
    $region14: #{mlp_forward.1} parent=1 // pred_check
      _
    $region15: #{mlp_forward.1} parent=1 // pred_check_branch
      %18 = sbr.rel (0) target = $region17
    $region16: #{mlp_forward.1} parent=1 // pred_region
      _
    $region17: #{mlp_forward.1} parent=1 // pred_fallthru
      _
    // Predicated region
    $region18: #{mlp_forward.1} parent=1 // pred_check
      _
    $region19: #{mlp_forward.1} parent=1 // pred_check_branch
      %20 = sbr.rel (0) target = $region21
    $region20: #{mlp_forward.1} parent=1 // pred_region
      _
    $region21: #{mlp_forward.1} parent=1 // pred_fallthru
      _
    %v21 = vld [vmem:[%s0] sm:$0xff]
    %v22 = vld [vmem:[%s0 + $0x8] sm:$0xff]
    %v23 = vmax.f32 %v21, 0.0
    %v24 = vmax.f32 %v22, 0.0
    %v25 = vld [vmem:[%s1] sm:$0xff]
    %v26 = vld [vmem:[%s1 + $0x8] sm:$0xff]
    %v27 = vld [vmem:[%s1 + $0x10] sm:$0xff]
    %v28 = vld [vmem:[%s1 + $0x18] sm:$0xff]
    %v29 = vld [vmem:[%s2] sm:$0x1]
    %v31 = vlaneseq
    %v32 = vshrl.u32 %v31, 7
    %v33 = vsub.s32 0, %v32
    %v34 = vrot.slane %v29, %v33
    %vm36 = vcmask 261120
    %v38 = vsel %vm36, %v23, 0
    %v41 = vsel %vm36, %v24, 0
    %43 = vmatprep.subr.mxu0 0.0
    %44 = vmatpush1.msra.mxu0 0.0
    %45 = vmatprep.subr.mxu0 0.0
    %46 = vmatpush1.msra.mxu0 0.0
    %47 = vmatprep.subr.mxu0 0.0
    %48 = vmatpush1.msra.mxu0 0.0
    %49 = vmatprep.subr.mxu0 0.0
    %50 = vmatpush1.msra.mxu0 0.0
    %51 = vmatprep.subr.mxu0 0.0
    %52 = vmatpush1.msra.mxu0 0.0
    %53 = vmatprep.subr.mxu0 0.0
    %54 = vmatpush1.msra.mxu0 0.0
    %55 = vmatprep.subr.mxu0 0.0
    %56 = vmatpush1.msra.mxu0 0.0
    %57 = vmatprep.subr.mxu0 0.0
    %58 = vmatpush1.msra.mxu0 0.0
    %59 = vmatprep.subr.mxu0 0.0
    %60 = vmatpush1.msra.mxu0 0.0
    %61 = vmatprep.subr.mxu0 0.0
    %62 = vmatpush1.msra.mxu0 0.0
    %63 = vmatprep.subr.mxu0 0.0
    %64 = vmatpush1.msra.mxu0 0.0
    %65 = vmatprep.subr.mxu0 0.0
    %66 = vmatpush1.msra.mxu0 0.0
    %67 = vmatprep.subr.mxu0 0.0
    %68 = vmatpush1.msra.mxu0 %v28
    %69 = vmatprep.subr.mxu0 0.0
    %70 = vmatpush1.msra.mxu0 %v27
    %71 = vmatprep.subr.mxu0 0.0
    %72 = vmatpush1.msra.mxu0 %v26
    %73 = vmatprep.subr.mxu0 0.0
    %74 = vmatpush1.msra.mxu0 %v25
    %75 = vmatprep.subr.mxu0 0.0
    %76 = vmatpush2.msra.mxu0 0.0
    %77 = vmatprep.subr.mxu0 0.0
    %78 = vmatpush2.msra.mxu0 0.0
    %79 = vmatprep.subr.mxu0 0.0
    %80 = vmatpush2.msra.mxu0 0.0
    %81 = vmatprep.subr.mxu0 0.0
    %82 = vmatpush2.msra.mxu0 0.0
    %83 = vmatprep.subr.mxu0 0.0
    %84 = vmatpush2.msra.mxu0 0.0
    %85 = vmatprep.subr.mxu0 0.0
    %86 = vmatpush2.msra.mxu0 0.0
    %87 = vmatprep.subr.mxu0 0.0
    %88 = vmatpush2.msra.mxu0 0.0
    %89 = vmatprep.subr.mxu0 0.0
    %90 = vmatpush2.msra.mxu0 0.0
    %91 = vmatprep.subr.mxu0 0.0
    %92 = vmatpush2.msra.mxu0 0.0
    %93 = vmatprep.subr.mxu0 0.0
    %94 = vmatpush2.msra.mxu0 0.0
    %95 = vmatprep.subr.mxu0 0.0
    %96 = vmatpush2.msra.mxu0 0.0
    %97 = vmatprep.subr.mxu0 0.0
    %98 = vmatpush2.msra.mxu0 0.0
    %99 = vmatprep.subr.mxu0 0.0
    %100 = vmatpush2.msra.mxu0 0.0
    %101 = vmatprep.subr.mxu0 0.0
    %102 = vmatpush2.msra.mxu0 0.0
    %103 = vmatprep.subr.mxu0 0.0
    %104 = vmatpush2.msra.mxu0 0.0
    %105 = vmatprep.subr.mxu0 0.0
    %106 = vmatpush2.msra.mxu0 0.0
    %107 = vmatprep.mubr.f32.mxu0 0.0
    %108 = vmatmul.mubr.f32.gmra.mxu0 %v38
    %v109 = vpop.f32.mrf.mxu0
    %v110 = vadd.f32 %v34, %v109
    %v111 = vpop.f32.mrf.mxu0
    %112 = vmatprep.mubr.f32.mxu0 0.0
    %113 = vmatmul.mubr.f32.gmra.mxu0 %v41
    %v114 = vpop.f32.mrf.mxu0
    %v115 = vadd.f32 %v34, %v114
    %v116 = vpop.f32.mrf.mxu0
    %117 = vdwg.mxu0
    %v118 = vsel %vm36, %v110, 0.0
    %119 = vadd.xlane.f32.xlu0 %v118
    %v120 = vpop.xlane.xlu0 %119
    %v121 = vsel %vm36, %v115, 0.0
    %122 = vadd.xlane.f32.xlu0 %v121
    %v123 = vpop.xlane.xlu0 %122
    %v124 = vrcp.pop 32.0
    %v125 = vmul.f32 %v120, %v124
    %v126 = vmul.f32 %v123, %v124
    %v127 = vsub.f32 %v110, %v125
    %v128 = vsub.f32 %v115, %v126
    %v129 = vmul.f32 %v127, %v127
    %v130 = vmul.f32 %v128, %v128
    %v131 = vsel %vm36, %v129, 0.0
    %132 = vadd.xlane.f32.xlu0 %v131
    %v133 = vpop.xlane.xlu0 %132
    %v134 = vsel %vm36, %v130, 0.0
    %135 = vadd.xlane.f32.xlu0 %v134
    %v136 = vpop.xlane.xlu0 %135
    %v137 = vmul.f32 %v133, %v124
    %v138 = vmul.f32 %v136, %v124
    %v139 = vadd.f32 %v137, 1e-05
    %v140 = vadd.f32 %v138, 1e-05
    %v141 = vrsqrt.pop %v139
    %v142 = vrsqrt.pop %v140
    %v143 = vmul.f32 %v127, %v141
    %v144 = vmul.f32 %v128, %v142
    %v145 = vld [vmem:[%s3] sm:$0x1]
    %v147 = vlaneseq
    %v148 = vshrl.u32 %v147, 7
    %v149 = vsub.s32 0, %v148
    %v150 = vrot.slane %v145, %v149
    %v152 = vmul.f32 %v143, %v150
    %v153 = vmul.f32 %v144, %v150
    %v154 = vld [vmem:[%s4] sm:$0x1]
    %v156 = vlaneseq
    %v157 = vshrl.u32 %v156, 7
    %v158 = vsub.s32 0, %v157
    %v159 = vrot.slane %v154, %v158
    %v161 = vadd.f32 %v152, %v159
    %v162 = vadd.f32 %v153, %v159
    %v163 = vadd.f32 %v21, %v161
    %v164 = vadd.f32 %v22, %v162
    %165 = vst.msk [vmem:[#allocation2] sm:$0xff] %vm36, %v163
    %166 = vst.msk [vmem:[#allocation2 + $0x8] sm:$0xff] %vm36, %v164
    // Predicated region
    $region22: #{mlp_forward.1} parent=1 // pred_check
      _
    $region23: #{mlp_forward.1} parent=1 // pred_check_branch
      %168 = sbr.rel (0) target = $region25
    $region24: #{mlp_forward.1} parent=1 // pred_region
      %s170 = ssub.s32 256, 256
      %171 = vsyncadd [#allocation3], %s170
      %s172 = sshll.u32 [#allocation2], 4
      %s173 = int_to_ptr.vmem [resolvable:$true] %s172
      %178 = dma.vmem_to_hbm [thread:$0]  %s173, 256, %s5, [#allocation3], 128, 128, 8
    $region25: #{mlp_forward.1} parent=1 // pred_fallthru
      _
    // Predicated region
    $region26: #{mlp_forward.1} parent=1 // pred_check
      _
    $region27: #{mlp_forward.1} parent=1 // pred_check_branch
      %180 = sbr.rel (0) target = $region29
    $region28: #{mlp_forward.1} parent=1 // pred_region
      %181 = dma.done [#allocation3], 256
    $region29: #{mlp_forward.1} parent=1 // pred_fallthru
      _
    %182 = vsyncpa [#allocation3], 1

</llo_original>
